<compile_context>
chip_gen: v7x
topology: tpu7x:2x2x1
jax: 0.10.0
libtpu: 0.0.40
codegen_flags: <defaults>
</compile_context>

<pallas_src>
import jax
import jax.numpy as jnp
from jax.experimental import pallas as pl
from jax.experimental.pallas import tpu as pltpu


def _round_up(n, m):
    return ((n + m - 1) // m) * m


def _simple_residual_kernel(x_ref, w_ref, bw_ref, sc_ref, o_ref):
    x = x_ref[...]                                                    # (TB, D) f32
    # One fused MXU matmul: columns [0, H) = fc1, column H = residual, rest = 0.
    h = jnp.dot(x, w_ref[...], preferred_element_type=jnp.float32)   # (TB, HP)
    bw = bw_ref[...]                                                  # (3, HP)
    h = h + bw[0:1, :]                                                # fc1 bias (0 elsewhere)

    # PReLU with a per-lane negative slope: alpha on fc1 lanes, 1.0 on the
    # residual lane and the zero-padded lanes (those pass through unchanged).
    act = jnp.where(h < 0, h * bw[2:3, :], h)

    # fc2 as VPU multiply + XLU lane reduction: bw[1] holds fc2 weights on
    # [0, H), 1.0 at column H (residual passthrough), 0 elsewhere.
    # sc_ref[0] is the pre-folded scalar bias (fc2.bias + residual.bias).
    out = jnp.sum(act * bw[1:2, :], axis=-1, keepdims=True) + sc_ref[0]
    o_ref[...] = out                                                  # (TB, 1)


def fuse_params(w1_t, b1, alpha, w2, b2, wr, br):
    """One-time host-side fusion/padding of the module parameters.

    Shapes (nn.Linear weights pre-transposed to (in, out)):
      w1_t: (D, H) fc1.weight.T    b1: (H,)  fc1.bias
      alpha: ()    PReLU weight (num_parameters=1)
      w2:   (H,)   fc2.weight[0]   b2: ()    fc2.bias[0]
      wr:   (D,)   residual.weight[0]   br: () residual.bias[0]

    Returns (w_fused (D, HP), bw (3, HP), scalars (1,)) with HP = 128-padded H+1.
    """
    D, H = w1_t.shape
    HP = _round_up(H + 1, 128)

    w_fused = (jnp.zeros((D, HP), jnp.float32)
               .at[:, :H].set(w1_t.astype(jnp.float32))
               .at[:, H].set(wr.astype(jnp.float32)))

    bias_row = jnp.zeros((HP,), jnp.float32).at[:H].set(b1.astype(jnp.float32))
    fc2_row = (jnp.zeros((HP,), jnp.float32)
               .at[:H].set(w2.astype(jnp.float32))
               .at[H].set(1.0))
    slope_row = (jnp.ones((HP,), jnp.float32)                         # 1.0 -> identity lanes
                 .at[:H].set(jnp.asarray(alpha, jnp.float32)))        # alpha -> PReLU lanes
    bw = jnp.stack([bias_row, fc2_row, slope_row])                    # (3, HP)

    scalars = (jnp.asarray(b2, jnp.float32) +
               jnp.asarray(br, jnp.float32)).reshape(1)               # (1,) [b2 + br]
    return w_fused, bw, scalars


def simple_residual_network(x, w_fused, bw, scalars, *, block_rows=1024):
    """x: (B, D) float32. Returns (B, 1) float32."""
    B, D = x.shape
    HP = w_fused.shape[1]

    TB = _round_up(min(block_rows, _round_up(B, 8)), 8)
    B_pad = _round_up(B, TB)
    if B_pad != B:
        x = jnp.pad(x, ((0, B_pad - B), (0, 0)))

    cost = pl.CostEstimate(
        flops=2 * B_pad * D * HP + 4 * B_pad * HP,
        transcendentals=0,
        bytes_accessed=B_pad * D * 4 + D * HP * 4 + 3 * HP * 4 + B_pad * 4,
    )

    out = pl.pallas_call(
        _simple_residual_kernel,
        out_shape=jax.ShapeDtypeStruct((B_pad, 1), jnp.float32),
        grid=(B_pad // TB,),
        in_specs=[
            pl.BlockSpec((TB, D), lambda i: (i, 0)),       # x: one batch tile / step
            pl.BlockSpec((D, HP), lambda i: (0, 0)),       # fused fc1+residual weights (resident)
            pl.BlockSpec((3, HP), lambda i: (0, 0)),       # rows: fc1 bias / fc2 weights / PReLU slope
            pl.BlockSpec(memory_space=pltpu.SMEM),         # [b2 + br] scalar
        ],
        out_specs=pl.BlockSpec((TB, 1), lambda i: (i, 0)),
        compiler_params=pltpu.CompilerParams(
            dimension_semantics=("parallel",)),            # dual-TC sharding on v7x
        cost_estimate=cost,
    )(x, w_fused, bw, scalars)
    return out[:B]


if __name__ == "__main__":
    key = jax.random.PRNGKey(0)
    k_x, k_w1, k_b1, k_w2, k_b2, k_wr, k_br = jax.random.split(key, 7)

    B, D, H = 200, 32, 64          # batch, input_dim, hidden_units[0]

    x = jax.random.normal(k_x, (B, D), dtype=jnp.float32)

    # Deterministic synthetic parameters (nn.Linear weights pre-transposed).
    w1_t = jax.random.normal(k_w1, (D, H), dtype=jnp.float32) * 0.1   # fc1.weight.T
    b1 = jax.random.normal(k_b1, (H,), dtype=jnp.float32) * 0.1       # fc1.bias
    alpha = jnp.asarray(0.25, jnp.float32)                            # nn.PReLU() default init
    w2 = jax.random.normal(k_w2, (H,), dtype=jnp.float32) * 0.1       # fc2.weight[0]
    b2 = jax.random.normal(k_b2, (), dtype=jnp.float32) * 0.1         # fc2.bias[0]
    wr = jax.random.normal(k_wr, (D,), dtype=jnp.float32) * 0.1       # residual.weight[0]
    br = jax.random.normal(k_br, (), dtype=jnp.float32) * 0.1         # residual.bias[0]

    w_fused, bw, scalars = fuse_params(w1_t, b1, alpha, w2, b2, wr, br)

    # block_rows=64 so the test exercises batch padding (200 -> 256) and a
    # multi-step parallel grid; production default is 1024 rows/step.
    out = simple_residual_network(x, w_fused, bw, scalars, block_rows=64)
    out = jax.block_until_ready(out)

    # Pure-JAX reference with the original (unfused) parameters.
    h_ref = x @ w1_t + b1[None, :]
    h_ref = jnp.where(h_ref > 0, h_ref, alpha * h_ref)
    ref = (h_ref @ w2 + b2 + x @ wr + br)[:, None]

    assert out.shape == (B, 1)
    assert jnp.allclose(out, ref, atol=1e-5, rtol=1e-5), float(jnp.max(jnp.abs(out - ref)))

    print("KERNEL_OK")
</pallas_src>

<mosaic_0001>
module attributes {stable_mosaic.version = 11 : i64} {
  func.func @_simple_residual_kernel(%arg0: i32, %arg1: memref<64x32xf32, #tpu.memory_space<vmem>>, %arg2: memref<32x128xf32, #tpu.memory_space<vmem>>, %arg3: memref<3x128xf32, #tpu.memory_space<vmem>>, %arg4: memref<1xf32, #tpu.memory_space<smem>>, %arg5: memref<64x1xf32, #tpu.memory_space<vmem>>) attributes {dimension_semantics = [#tpu.dimension_semantics<parallel>], iteration_bounds = array<i64: 4>, scalar_prefetch = 0 : i64, scratch_operands = 0 : i64, tpu.core_type = #tpu.core_type<tc>, window_params = [{transform_indices = @transform_0, window_bounds = array<i64: 64, 32>}, {pipeline_mode = #tpu.pipeline_mode<synchronous>, transform_indices = @transform_1, window_bounds = array<i64: 32, 128>}, {pipeline_mode = #tpu.pipeline_mode<synchronous>, transform_indices = @transform_2, window_bounds = array<i64: 3, 128>}, {transform_indices = @transform_3, window_bounds = array<i64: 1>}, {transform_indices = @transform_4, window_bounds = array<i64: 64, 1>}]} {
    %c0 = arith.constant 0 : index
    %c0_0 = arith.constant 0 : index
    %0 = vector.load %arg1[%c0, %c0_0] : memref<64x32xf32, #tpu.memory_space<vmem>>, vector<64x32xf32>
    %c0_1 = arith.constant 0 : index
    %c0_2 = arith.constant 0 : index
    %1 = vector.load %arg2[%c0_1, %c0_2] : memref<32x128xf32, #tpu.memory_space<vmem>>, vector<32x128xf32>
    %cst = arith.constant dense<0.000000e+00> : vector<64x128xf32>
    %2 = tpu.matmul %0, %1, %cst {dimension_numbers = #tpu.dot_dimension_numbers<[1], [0], [0], [1], [0, 0, 1, 1], [], []>} : vector<64x32xf32>, vector<32x128xf32>, vector<64x128xf32> -> vector<64x128xf32>
    %c0_3 = arith.constant 0 : index
    %c0_4 = arith.constant 0 : index
    %3 = vector.load %arg3[%c0_3, %c0_4] : memref<3x128xf32, #tpu.memory_space<vmem>>, vector<3x128xf32>
    %4 = vector.extract_strided_slice %3 {offsets = [0, 0], sizes = [1, 128], strides = [1, 1]} : vector<3x128xf32> to vector<1x128xf32>
    %5 = vector.broadcast %4 : vector<1x128xf32> to vector<64x128xf32>
    %6 = arith.addf %2, %5 : vector<64x128xf32>
    %cst_5 = arith.constant 0.000000e+00 : f32
    %7 = vector.broadcast %cst_5 : f32 to vector<64x128xf32>
    %8 = arith.cmpf olt, %6, %7 : vector<64x128xf32>
    %9 = vector.extract_strided_slice %3 {offsets = [2, 0], sizes = [1, 128], strides = [1, 1]} : vector<3x128xf32> to vector<1x128xf32>
    %10 = vector.broadcast %9 : vector<1x128xf32> to vector<64x128xf32>
    %11 = arith.mulf %6, %10 : vector<64x128xf32>
    %12 = arith.select %8, %11, %6 : vector<64x128xi1>, vector<64x128xf32>
    %13 = vector.extract_strided_slice %3 {offsets = [1, 0], sizes = [1, 128], strides = [1, 1]} : vector<3x128xf32> to vector<1x128xf32>
    %14 = vector.broadcast %13 : vector<1x128xf32> to vector<64x128xf32>
    %15 = arith.mulf %12, %14 : vector<64x128xf32>
    %cst_6 = arith.constant dense<0.000000e+00> : vector<64xf32>
    %16 = vector.multi_reduction <add>, %15, %cst_6 [1] : vector<64x128xf32> to vector<64xf32>
    %17 = vector.shape_cast %16 : vector<64xf32> to vector<64x1xf32>
    %c0_7 = arith.constant 0 : index
    %18 = memref.load %arg4[%c0_7] : memref<1xf32, #tpu.memory_space<smem>>
    %19 = vector.broadcast %18 : f32 to vector<64x1xf32>
    %20 = arith.addf %17, %19 : vector<64x1xf32>
    %c0_8 = arith.constant 0 : index
    %c0_9 = arith.constant 0 : index
    %21 = vector.load %arg5[%c0_8, %c0_9] : memref<64x1xf32, #tpu.memory_space<vmem>>, vector<64x1xf32>
    tpu.vector_store %arg5[%c0_8, %c0_9], %20 {strides = array<i32>} : memref<64x1xf32, #tpu.memory_space<vmem>>, vector<64x1xf32>,
    return
  }
  func.func @transform_0(%arg0: i32) -> (i32, i32) {
    %c0_i32 = arith.constant 0 : i32
    %c0_i32_0 = arith.constant 0 : i32
    return %arg0, %c0_i32 : i32, i32
  }
  func.func @transform_1(%arg0: i32) -> (i32, i32) {
    %c0_i32 = arith.constant 0 : i32
    %c0_i32_0 = arith.constant 0 : i32
    %c0_i32_1 = arith.constant 0 : i32
    return %c0_i32, %c0_i32_0 : i32, i32
  }
  func.func @transform_2(%arg0: i32) -> (i32, i32) {
    %c0_i32 = arith.constant 0 : i32
    %c0_i32_0 = arith.constant 0 : i32
    %c0_i32_1 = arith.constant 0 : i32
    return %c0_i32, %c0_i32_0 : i32, i32
  }
  func.func @transform_3(%arg0: i32) -> i32 {
    %c0_i32 = arith.constant 0 : i32
    %c0_i32_0 = arith.constant 0 : i32
    return %c0_i32 : i32
  }
  func.func @transform_4(%arg0: i32) -> (i32, i32) {
    %c0_i32 = arith.constant 0 : i32
    %c0_i32_0 = arith.constant 0 : i32
    return %arg0, %c0_i32 : i32, i32
  }
}

</mosaic_0001>

<llo_original>
// kernel: tpu_custom_call.1
$region0: #{tpu_custom_call.1}
  #allocation0 [shape = 'u32[]', space=smem, size = 0x4, offset = 0x4, fixed_abs, tag = 'smem constant byte address 0x4 - core index']
  #allocation1 [shape = 'u32[144,128]{1,0:T(1,128)}', space=vmem, size = 0x12000, scoped, tag = 'internal scratch']
  #allocation2 [shape = 'f32[1]{0:T(128)S(6)}', space=smem, size = 0x200, scoped, tag = 'scoped memory for tpu_custom_call.1']
  %s0 = inlined_call_operand.vmem [shape: f32[256,32], index: 0, kind: input, shape index: {}]
  %s1 = inlined_call_operand.vmem [shape: f32[32,128], index: 1, kind: input, shape index: {}]
  %s2 = inlined_call_operand.vmem [shape: f32[3,128], index: 2, kind: input, shape index: {}]
  %s3 = inlined_call_operand.<no memory space> [shape: f32[1], index: 3, kind: input, shape index: {}]
  %s4 = inlined_call_operand.vmem [shape: f32[256,1], index: 4, kind: output, shape index: {}]
  %s5 = sld [smem:[#allocation0]]
  $region49: #{tpu_custom_call.1} parent=0
    _
  %s7 = ssub.s32 1, %s5
  %s8 = scalar_select 0, %s7, %s5
  %9 = sst [smem:[#allocation2]] %s3
  loop: start=0, step=1, limit=6
  $region2: #{tpu_custom_call.1} parent=0 // loop_pre_header
    _
  $region3: #{tpu_custom_call.1} parent=0 // loop_header
    %s11 = sphi 0, %s15
    %p12 = scmp.ge.s32.totalorder %s11, 6
    %s21 = sphi 0, %s23
    %s24 = sphi 0, %s21
    %s25 = sphi 0, %s24
    %s41 = sphi 0, %s25
    %s45 = sphi 0, %s45
    %s47 = sphi 0, %s45
    %s48 = sphi 0, %s47
    %s62 = sphi 0, %s48
    %s66 = sphi 0, %s66
    %s68 = sphi 0, %s66
    %s69 = sphi 0, %s68
    %s83 = sphi 0, %s69
    %s87 = sphi 0, %s87
    %s89 = sphi 0, %s87
    %s90 = sphi 0, %s89
    %s104 = sphi 0, %s90
    %s110 = sphi 0, %s112
    %s113 = sphi 0, %s110
    %s114 = sphi 0, %s113
    %s130 = sphi 0, %s114
  $region4: #{tpu_custom_call.1} parent=0 // loop_header_branch
    %14 = sbr.rel (%p12) target = $region8
  $region5: #{tpu_custom_call.1} parent=0 // loop_body
    %s16 = ssub.s32 %s11, 1
    %s17 = ssub.s32 %s11, 2
    %s18 = sadd.s32 %s11, 1
    %s19 = ssub.s32 %s11, %s18
    %p20 = scmp.eq.s32.totalorder %s19, 0
    %s22 = sadd.s32 %s21, 1
    %s23 = scalar_select %p20, %s21, %s22
    %p26 = pneg %p20
    %p27 = scmp.eq.s32.totalorder %s11, 3
    %p28 = por %p26, %p27
    %p29 = scmp.ne.s32.totalorder %s21, %s24
    %p30 = scmp.eq.s32.totalorder %s11, 0
    %p31 = por %p29, %p30
    %p32 = scmp.ne.s32.totalorder %s21, %s24
    %p33 = scmp.eq.s32.totalorder %s16, 3
    %p34 = por %p32, %p33
    %p35 = scmp.ne.s32.totalorder %s24, %s25
    %p36 = scmp.eq.s32.totalorder %s16, 0
    %p37 = por %p35, %p36
    %p38 = scmp.ne.s32.totalorder %s24, %s25
    %p39 = scmp.eq.s32.totalorder %s17, 3
    %p40 = por %p38, %p39
    %p42 = scmp.ne.s32.totalorder %s25, %s41
    %p43 = scmp.eq.s32.totalorder %s17, 0
    %p44 = por %p42, %p43
    %s46 = sadd.s32 %s45, 1
    %p49 = scmp.eq.s32.totalorder %s11, 3
    %p50 = scmp.ne.s32.totalorder %s45, %s47
    %p51 = scmp.eq.s32.totalorder %s11, 0
    %p52 = por %p50, %p51
    %p53 = scmp.ne.s32.totalorder %s45, %s47
    %p54 = scmp.eq.s32.totalorder %s16, 3
    %p55 = por %p53, %p54
    %p56 = scmp.ne.s32.totalorder %s47, %s48
    %p57 = scmp.eq.s32.totalorder %s16, 0
    %p58 = por %p56, %p57
    %p59 = scmp.ne.s32.totalorder %s47, %s48
    %p60 = scmp.eq.s32.totalorder %s17, 3
    %p61 = por %p59, %p60
    %p63 = scmp.ne.s32.totalorder %s48, %s62
    %p64 = scmp.eq.s32.totalorder %s17, 0
    %p65 = por %p63, %p64
    %s67 = sadd.s32 %s66, 1
    %p70 = scmp.eq.s32.totalorder %s11, 3
    %p71 = scmp.ne.s32.totalorder %s66, %s68
    %p72 = scmp.eq.s32.totalorder %s11, 0
    %p73 = por %p71, %p72
    %p74 = scmp.ne.s32.totalorder %s66, %s68
    %p75 = scmp.eq.s32.totalorder %s16, 3
    %p76 = por %p74, %p75
    %p77 = scmp.ne.s32.totalorder %s68, %s69
    %p78 = scmp.eq.s32.totalorder %s16, 0
    %p79 = por %p77, %p78
    %p80 = scmp.ne.s32.totalorder %s68, %s69
    %p81 = scmp.eq.s32.totalorder %s17, 3
    %p82 = por %p80, %p81
    %p84 = scmp.ne.s32.totalorder %s69, %s83
    %p85 = scmp.eq.s32.totalorder %s17, 0
    %p86 = por %p84, %p85
    %s88 = sadd.s32 %s87, 1
    %p91 = scmp.eq.s32.totalorder %s11, 3
    %p92 = scmp.ne.s32.totalorder %s87, %s89
    %p93 = scmp.eq.s32.totalorder %s11, 0
    %p94 = por %p92, %p93
    %p95 = scmp.ne.s32.totalorder %s87, %s89
    %p96 = scmp.eq.s32.totalorder %s16, 3
    %p97 = por %p95, %p96
    %p98 = scmp.ne.s32.totalorder %s89, %s90
    %p99 = scmp.eq.s32.totalorder %s16, 0
    %p100 = por %p98, %p99
    %p101 = scmp.ne.s32.totalorder %s89, %s90
    %p102 = scmp.eq.s32.totalorder %s17, 3
    %p103 = por %p101, %p102
    %p105 = scmp.ne.s32.totalorder %s90, %s104
    %p106 = scmp.eq.s32.totalorder %s17, 0
    %p107 = por %p105, %p106
    %s108 = ssub.s32 %s11, %s18
    %p109 = scmp.eq.s32.totalorder %s108, 0
    %s111 = sadd.s32 %s110, 1
    %s112 = scalar_select %p109, %s110, %s111
    %p115 = pneg %p109
    %p116 = scmp.eq.s32.totalorder %s11, 3
    %p117 = por %p115, %p116
    %p118 = scmp.ne.s32.totalorder %s110, %s113
    %p119 = scmp.eq.s32.totalorder %s11, 0
    %p120 = por %p118, %p119
    %p121 = scmp.ne.s32.totalorder %s110, %s113
    %p122 = scmp.eq.s32.totalorder %s16, 3
    %p123 = por %p121, %p122
    %p124 = scmp.ne.s32.totalorder %s113, %s114
    %p125 = scmp.eq.s32.totalorder %s16, 0
    %p126 = por %p124, %p125
    %p127 = scmp.ne.s32.totalorder %s113, %s114
    %p128 = scmp.eq.s32.totalorder %s17, 3
    %p129 = por %p127, %p128
    %p131 = scmp.ne.s32.totalorder %s114, %s130
    %p132 = scmp.eq.s32.totalorder %s17, 0
    %p133 = por %p131, %p132
    %p134 = scmp.le.s32.totalorder 1, %s11
    %p135 = scmp.lt.s32.totalorder %s11, 5
    %p136 = pnand %p134, %p135
    %p137 = pneg %p136
    // Predicated region
    $region9: #{tpu_custom_call.1} parent=5 // pred_check
      _
    $region10: #{tpu_custom_call.1} parent=5 // pred_check_branch
      %139 = sbr.rel (%p136) target = $region12
    $region11: #{tpu_custom_call.1} parent=5 // pred_region
      %s140 = ssub.s32 %s11, 1
      // Predicated region
      $region13: #{tpu_custom_call.1} parent=11 // pred_check
        %p141 = pneg %p58
      $region14: #{tpu_custom_call.1} parent=11 // pred_check_branch
        %143 = sbr.rel (%p141) target = $region16
      $region15: #{tpu_custom_call.1} parent=11 // pred_region
        _
      $region16: #{tpu_custom_call.1} parent=11 // pred_fallthru
        _
      // Predicated region
      $region17: #{tpu_custom_call.1} parent=11 // pred_check
        %p144 = pneg %p79
      $region18: #{tpu_custom_call.1} parent=11 // pred_check_branch
        %146 = sbr.rel (%p144) target = $region20
      $region19: #{tpu_custom_call.1} parent=11 // pred_region
        _
      $region20: #{tpu_custom_call.1} parent=11 // pred_fallthru
        _
      // Predicated region
      $region21: #{tpu_custom_call.1} parent=11 // pred_check
        %p147 = pneg %p100
      $region22: #{tpu_custom_call.1} parent=11 // pred_check_branch
        %149 = sbr.rel (%p147) target = $region24
      $region23: #{tpu_custom_call.1} parent=11 // pred_region
        _
      $region24: #{tpu_custom_call.1} parent=11 // pred_fallthru
        _
    $region12: #{tpu_custom_call.1} parent=5 // pred_fallthru
      _
    %p150 = scmp.lt.s32.totalorder %s11, 4
    // Predicated region
    $region25: #{tpu_custom_call.1} parent=5 // pred_check
      %p151 = pneg %p150
    $region26: #{tpu_custom_call.1} parent=5 // pred_check_branch
      %153 = sbr.rel (%p151) target = $region28
    $region27: #{tpu_custom_call.1} parent=5 // pred_region
      // Predicated region
      $region29: #{tpu_custom_call.1} parent=27 // pred_check
        %p154 = pneg %p31
      $region30: #{tpu_custom_call.1} parent=27 // pred_check_branch
        %156 = sbr.rel (%p154) target = $region32
      $region31: #{tpu_custom_call.1} parent=27 // pred_region
        %s157 = smul.u32 8, %s11
        %p158 = scmp.lt.s32.totalorder %s157, 31
        %s159 = scalar_select %p158, %s157, 31
        %s160 = smul.addr %s159, 8
        %s161 = scalar_lea.vmem %s0, %s160
        %s162 = smul.u32 8, %s11
      $region32: #{tpu_custom_call.1} parent=27 // pred_fallthru
        _
    $region28: #{tpu_custom_call.1} parent=5 // pred_fallthru
      _
    %p163 = scmp.le.s32.totalorder 1, %s11
    %p164 = scmp.lt.s32.totalorder %s11, 5
    %p165 = pnand %p163, %p164
    %p166 = pneg %p165
    // Predicated region
    $region33: #{tpu_custom_call.1} parent=5 // pred_check
      _
    $region34: #{tpu_custom_call.1} parent=5 // pred_check_branch
      %168 = sbr.rel (%p165) target = $region36
    $region35: #{tpu_custom_call.1} parent=5 // pred_region
      %s169 = ssub.s32 %s11, 1
      %s170 = smul.u32 8, %s16
      %p171 = scmp.lt.s32.totalorder %s170, 31
      %s172 = scalar_select %p171, %s170, 31
      %s173 = smul.addr %s172, 8
      %s174 = scalar_lea.vmem %s0, %s173
      %p175 = pneg %p37
      %p176 = pneg %p34
      %p177 = pneg %p58
      %p178 = pneg %p55
      %p179 = pneg %p79
      %p180 = pneg %p76
      %p181 = pneg %p100
      %p182 = pneg %p97
      %p183 = pneg %p126
      %p184 = pneg %p123
      %s185 = smul.u32 8, %s16
      %p186 = scmp.lt.s32.totalorder %s185, 31
      %s187 = scalar_select %p186, %s185, 31
      %s188 = smul.addr %s187, 8
      %s189 = scalar_lea.vmem %s4, %s188
      %s190 = smul.u32 8, %s16
      %p191 = scmp.lt.s32.totalorder %s190, 31
      %s192 = scalar_select %p191, %s190, 31
      %s193 = smul.addr %s192, 8
      %s194 = scalar_lea.vmem %s0, %s193
      %s195 = smul.u32 8, %s16
      %s196 = smul.u32 8, %s16
      %p197 = scmp.lt.s32.totalorder %s196, 31
      %s198 = scalar_select %p197, %s196, 31
      %s199 = smul.addr %s198, 8
      %s200 = scalar_lea.vmem %s4, %s199
      %s201 = smul.u32 8, %s16
      %v202 = vld [vmem:[%s194] sm:$0xff]
      %v203 = vld [vmem:[%s194 + $0x8] sm:$0xff]
      %v204 = vld [vmem:[%s194 + $0x10] sm:$0xff]
      %v205 = vld [vmem:[%s194 + $0x18] sm:$0xff]
      %v206 = vld [vmem:[%s194 + $0x20] sm:$0xff]
      %v207 = vld [vmem:[%s194 + $0x28] sm:$0xff]
      %v208 = vld [vmem:[%s194 + $0x30] sm:$0xff]
      %v209 = vld [vmem:[%s194 + $0x38] sm:$0xff]
      %v210 = vld [vmem:[%s1] sm:$0xff]
      %v211 = vld [vmem:[%s1 + $0x8] sm:$0xff]
      %v212 = vld [vmem:[%s1 + $0x10] sm:$0xff]
      %v213 = vld [vmem:[%s1 + $0x18] sm:$0xff]
      %v214 = vld [vmem:[%s2] sm:$0x7]
      %v215 = vlaneseq
      %v216 = vshrl.u32 %v215, 7
      %v217 = vsub.s32 0, %v216
      %v218 = vrot.slane %v214, %v217
      %vm219 = vcmask 261120
      %v221 = vsel %vm219, %v202, 0
      %v224 = vsel %vm219, %v203, 0
      %v227 = vsel %vm219, %v204, 0
      %v230 = vsel %vm219, %v205, 0
      %v233 = vsel %vm219, %v206, 0
      %v236 = vsel %vm219, %v207, 0
      %v239 = vsel %vm219, %v208, 0
      %v242 = vsel %vm219, %v209, 0
      %244 = vmatprep.subr.mxu0 0.0
      %245 = vmatpush1.msra.mxu0 %v210
      %246 = vmatprep.subr.mxu0 0.0
      %247 = vmatpush1.msra.mxu0 %v211
      %248 = vmatprep.subr.mxu0 0.0
      %249 = vmatpush1.msra.mxu0 %v212
      %250 = vmatprep.subr.mxu0 0.0
      %251 = vmatpush1.msra.mxu0 %v213
      %252 = vmatprep.subr.mxu0 0.0
      %253 = vmatpush1.msra.mxu0 0.0
      %254 = vmatprep.subr.mxu0 0.0
      %255 = vmatpush1.msra.mxu0 0.0
      %256 = vmatprep.subr.mxu0 0.0
      %257 = vmatpush1.msra.mxu0 0.0
      %258 = vmatprep.subr.mxu0 0.0
      %259 = vmatpush1.msra.mxu0 0.0
      %260 = vmatprep.subr.mxu0 0.0
      %261 = vmatpush1.msra.mxu0 0.0
      %262 = vmatprep.subr.mxu0 0.0
      %263 = vmatpush1.msra.mxu0 0.0
      %264 = vmatprep.subr.mxu0 0.0
      %265 = vmatpush1.msra.mxu0 0.0
      %266 = vmatprep.subr.mxu0 0.0
      %267 = vmatpush1.msra.mxu0 0.0
      %268 = vmatprep.subr.mxu0 0.0
      %269 = vmatpush1.msra.mxu0 0.0
      %270 = vmatprep.subr.mxu0 0.0
      %271 = vmatpush1.msra.mxu0 0.0
      %272 = vmatprep.subr.mxu0 0.0
      %273 = vmatpush1.msra.mxu0 0.0
      %274 = vmatprep.subr.mxu0 0.0
      %275 = vmatpush1.msra.mxu0 0.0
      %276 = vmatprep.subr.mxu0 0.0
      %277 = vmatpush1.msra.mxu0 0.0
      %278 = vmatprep.subr.mxu0 0.0
      %279 = vmatpush1.msra.mxu0 0.0
      %280 = vmatprep.subr.mxu0 0.0
      %281 = vmatpush1.msra.mxu0 0.0
      %282 = vmatprep.subr.mxu0 0.0
      %283 = vmatpush1.msra.mxu0 0.0
      %284 = vmatprep.subr.mxu0 0.0
      %285 = vmatpush1.msra.mxu0 0.0
      %286 = vmatprep.subr.mxu0 0.0
      %287 = vmatpush1.msra.mxu0 0.0
      %288 = vmatprep.subr.mxu0 0.0
      %289 = vmatpush1.msra.mxu0 0.0
      %290 = vmatprep.subr.mxu0 0.0
      %291 = vmatpush1.msra.mxu0 0.0
      %292 = vmatprep.subr.mxu0 0.0
      %293 = vmatpush1.msra.mxu0 0.0
      %294 = vmatprep.subr.mxu0 0.0
      %295 = vmatpush1.msra.mxu0 0.0
      %296 = vmatprep.subr.mxu0 0.0
      %297 = vmatpush1.msra.mxu0 0.0
      %298 = vmatprep.subr.mxu0 0.0
      %299 = vmatpush1.msra.mxu0 0.0
      %300 = vmatprep.subr.mxu0 0.0
      %301 = vmatpush1.msra.mxu0 0.0
      %302 = vmatprep.subr.mxu0 0.0
      %303 = vmatpush1.msra.mxu0 0.0
      %304 = vmatprep.subr.mxu0 0.0
      %305 = vmatpush1.msra.mxu0 0.0
      %306 = vmatprep.subr.mxu0 0.0
      %307 = vmatpush1.msra.mxu0 0.0
      %308 = vmatprep.mubr.f32.mxu0 0.0
      %309 = vmatmul.mubr.f32.gmra.mrb[0].mxu0 %v221
      %v310 = vpop.f32.mrb[0].mxu0
      %v311 = vadd.f32 %v218, %v310
      %v312 = vpop.f32.mrb[0].mxu0
      %313 = vmatprep.mubr.f32.mxu0 0.0
      %314 = vmatmul.mubr.f32.gmra.mrb[0].mxu0 %v224
      %v315 = vpop.f32.mrb[0].mxu0
      %v316 = vadd.f32 %v218, %v315
      %v317 = vpop.f32.mrb[0].mxu0
      %318 = vmatprep.mubr.f32.mxu0 0.0
      %319 = vmatmul.mubr.f32.gmra.mrb[0].mxu0 %v227
      %v320 = vpop.f32.mrb[0].mxu0
      %v321 = vadd.f32 %v218, %v320
      %v322 = vpop.f32.mrb[0].mxu0
      %323 = vmatprep.mubr.f32.mxu0 0.0
      %324 = vmatmul.mubr.f32.gmra.mrb[0].mxu0 %v230
      %v325 = vpop.f32.mrb[0].mxu0
      %v326 = vadd.f32 %v218, %v325
      %v327 = vpop.f32.mrb[0].mxu0
      %328 = vmatprep.mubr.f32.mxu0 0.0
      %329 = vmatmul.mubr.f32.gmra.mrb[0].mxu0 %v233
      %v330 = vpop.f32.mrb[0].mxu0
      %v331 = vadd.f32 %v218, %v330
      %v332 = vpop.f32.mrb[0].mxu0
      %333 = vmatprep.mubr.f32.mxu0 0.0
      %334 = vmatmul.mubr.f32.gmra.mrb[0].mxu0 %v236
      %v335 = vpop.f32.mrb[0].mxu0
      %v336 = vadd.f32 %v218, %v335
      %v337 = vpop.f32.mrb[0].mxu0
      %338 = vmatprep.mubr.f32.mxu0 0.0
      %339 = vmatmul.mubr.f32.gmra.mrb[0].mxu0 %v239
      %v340 = vpop.f32.mrb[0].mxu0
      %v341 = vadd.f32 %v218, %v340
      %v342 = vpop.f32.mrb[0].mxu0
      %343 = vmatprep.mubr.f32.mxu0 0.0
      %344 = vmatmul.mubr.f32.gmra.mrb[0].mxu0 %v242
      %v345 = vpop.f32.mrb[0].mxu0
      %v346 = vadd.f32 %v218, %v345
      %v347 = vpop.f32.mrb[0].mxu0
      %348 = vdwg.mxu0
      %vm349 = vcmp.lt.f32.partialorder %v311, 0.0
      %vm350 = vcmp.lt.f32.partialorder %v316, 0.0
      %vm351 = vcmp.lt.f32.partialorder %v321, 0.0
      %vm352 = vcmp.lt.f32.partialorder %v326, 0.0
      %vm353 = vcmp.lt.f32.partialorder %v331, 0.0
      %vm354 = vcmp.lt.f32.partialorder %v336, 0.0
      %vm355 = vcmp.lt.f32.partialorder %v341, 0.0
      %vm356 = vcmp.lt.f32.partialorder %v346, 0.0
      %v357 = vlaneseq
      %v358 = vshrl.u32 %v357, 7
      %v359 = vsub.s32 2, %v358
      %v360 = vrot.slane %v214, %v359
      %v361 = vmul.f32 %v311, %v360
      %v362 = vmul.f32 %v316, %v360
      %v363 = vmul.f32 %v321, %v360
      %v364 = vmul.f32 %v326, %v360
      %v365 = vmul.f32 %v331, %v360
      %v366 = vmul.f32 %v336, %v360
      %v367 = vmul.f32 %v341, %v360
      %v368 = vmul.f32 %v346, %v360
      %v369 = vsel %vm349, %v361, %v311
      %v370 = vsel %vm350, %v362, %v316
      %v371 = vsel %vm351, %v363, %v321
      %v372 = vsel %vm352, %v364, %v326
      %v373 = vsel %vm353, %v365, %v331
      %v374 = vsel %vm354, %v366, %v336
      %v375 = vsel %vm355, %v367, %v341
      %v376 = vsel %vm356, %v368, %v346
      %v377 = vlaneseq
      %v378 = vshrl.u32 %v377, 7
      %v379 = vsub.s32 1, %v378
      %v380 = vrot.slane %v214, %v379
      %v381 = vmul.f32 %v369, %v380
      %v382 = vmul.f32 %v370, %v380
      %v383 = vmul.f32 %v371, %v380
      %v384 = vmul.f32 %v372, %v380
      %v385 = vmul.f32 %v373, %v380
      %v386 = vmul.f32 %v374, %v380
      %v387 = vmul.f32 %v375, %v380
      %v388 = vmul.f32 %v376, %v380
      %389 = vadd.xlane.f32.xlu0 %v381
      %v390 = vpop.xlane.xlu0 %389
      %391 = vadd.xlane.f32.xlu0 %v382
      %v392 = vpop.xlane.xlu0 %391
      %393 = vadd.xlane.f32.xlu0 %v383
      %v394 = vpop.xlane.xlu0 %393
      %395 = vadd.xlane.f32.xlu0 %v384
      %v396 = vpop.xlane.xlu0 %395
      %397 = vadd.xlane.f32.xlu0 %v385
      %v398 = vpop.xlane.xlu0 %397
      %399 = vadd.xlane.f32.xlu0 %v386
      %v400 = vpop.xlane.xlu0 %399
      %401 = vadd.xlane.f32.xlu0 %v387
      %v402 = vpop.xlane.xlu0 %401
      %403 = vadd.xlane.f32.xlu0 %v388
      %v404 = vpop.xlane.xlu0 %403
      %s405 = sld [smem:[#allocation2]]
      %v406 = vstv %s405
      %v407 = vadd.f32 %v390, %v406
      %v408 = vadd.f32 %v392, %v406
      %v409 = vadd.f32 %v394, %v406
      %v410 = vadd.f32 %v396, %v406
      %v411 = vadd.f32 %v398, %v406
      %v412 = vadd.f32 %v400, %v406
      %v413 = vadd.f32 %v402, %v406
      %v414 = vadd.f32 %v404, %v406
      %vm415 = vcmask 7168
      %416 = vst.msk [vmem:[%s200] sm:$0xff] %vm415, %v407
      %417 = vst.msk [vmem:[%s200 + $0x8] sm:$0xff] %vm415, %v408
      %418 = vst.msk [vmem:[%s200 + $0x10] sm:$0xff] %vm415, %v409
      %419 = vst.msk [vmem:[%s200 + $0x18] sm:$0xff] %vm415, %v410
      %420 = vst.msk [vmem:[%s200 + $0x20] sm:$0xff] %vm415, %v411
      %421 = vst.msk [vmem:[%s200 + $0x28] sm:$0xff] %vm415, %v412
      %422 = vst.msk [vmem:[%s200 + $0x30] sm:$0xff] %vm415, %v413
      %423 = vst.msk [vmem:[%s200 + $0x38] sm:$0xff] %vm415, %v414
      %s424 = smul.u32 8, %s16
      %p425 = scmp.lt.s32.totalorder %s424, 31
      %s426 = scalar_select %p425, %s424, 31
      %s427 = smul.addr %s426, 8
      %s428 = scalar_lea.vmem %s4, %s427
      // Predicated region
      $region37: #{tpu_custom_call.1} parent=35 // pred_check
        %p429 = pneg %p123
      $region38: #{tpu_custom_call.1} parent=35 // pred_check_branch
        %431 = sbr.rel (%p429) target = $region40
      $region39: #{tpu_custom_call.1} parent=35 // pred_region
        %s432 = smul.u32 8, %s16
      $region40: #{tpu_custom_call.1} parent=35 // pred_fallthru
        _
    $region36: #{tpu_custom_call.1} parent=5 // pred_fallthru
      _
    %p433 = scmp.le.s32.totalorder 2, %s11
    // Predicated region
    $region41: #{tpu_custom_call.1} parent=5 // pred_check
      %p434 = pneg %p433
    $region42: #{tpu_custom_call.1} parent=5 // pred_check_branch
      %436 = sbr.rel (%p434) target = $region44
    $region43: #{tpu_custom_call.1} parent=5 // pred_region
      %s437 = ssub.s32 %s11, 2
      // Predicated region
      $region45: #{tpu_custom_call.1} parent=43 // pred_check
        %p438 = pneg %p129
      $region46: #{tpu_custom_call.1} parent=43 // pred_check_branch
        %440 = sbr.rel (%p438) target = $region48
      $region47: #{tpu_custom_call.1} parent=43 // pred_region
        %s441 = smul.u32 8, %s17
        %p442 = scmp.lt.s32.totalorder %s441, 31
        %s443 = scalar_select %p442, %s441, 31
        %s444 = smul.addr %s443, 8
        %s445 = scalar_lea.vmem %s4, %s444
      $region48: #{tpu_custom_call.1} parent=43 // pred_fallthru
        _
    $region44: #{tpu_custom_call.1} parent=5 // pred_fallthru
      _
  $region6: #{tpu_custom_call.1} parent=0 // loop_footer
    %s15 = sadd.s32 1, %s11
  $region7: #{tpu_custom_call.1} parent=0 // loop_footer_branch
    %10 = sbr.rel target = $region3
  $region8: #{tpu_custom_call.1} parent=0 // loop_exit
    _

</llo_original>
